<compile_context>
chip_gen: v7x
topology: tpu7x:2x2x1
jax: 0.10.0
libtpu: 0.0.40
codegen_flags: <defaults>
</compile_context>

<pallas_src>
import functools

import jax
import jax.numpy as jnp
import numpy as np
from jax.experimental import pallas as pl
from jax.experimental.pallas import tpu as pltpu


# ---------------------------------------------------------------------------
# Kernel
# ---------------------------------------------------------------------------
def _maxpool_kernel(x_ref, o_ref, *, nt, n_total, need_mask, fill):
    """x_ref: (rt, nt) tile of the (R, N) view; o_ref: (rt, 1) running max."""
    n_idx = pl.program_id(1)
    x = x_ref[...]

    if need_mask:  # static: only emitted when N % nt != 0
        col = jax.lax.broadcasted_iota(jnp.int32, x.shape, 1)
        x = jnp.where(n_idx * nt + col < n_total, x, fill)

    partial = jnp.max(x, axis=-1, keepdims=True)  # (rt, 1)

    @pl.when(n_idx == 0)  # first point tile: initialize resident accumulator
    def _init():
        o_ref[...] = partial

    @pl.when(n_idx > 0)  # later point tiles: accumulate
    def _acc():
        o_ref[...] = jnp.maximum(o_ref[...], partial)


# ---------------------------------------------------------------------------
# Tiling heuristics
# ---------------------------------------------------------------------------
def _round_down(v, m):
    return (v // m) * m


def _choose_tiles(R, N, itemsize, per_buffer_bytes):
    """Pick (rt, nt) obeying the (8, 128) layout rules; grow the point tile first."""
    budget = max(per_buffer_bytes // itemsize, 8 * 128)  # elements per buffer
    min_rt = R if R < 8 else 8

    # Point (reduction) axis first: prefer the full extent -> one contiguous
    # HBM run per row and no reduction carry.
    if N <= 128 or min_rt * N <= budget:
        nt = N  # full extent (always layout-legal)
    else:
        nt = _round_down(budget // min_rt, 128)
        nt = max(nt, 128)
        nt = min(nt, _round_down(N, 128))

    # Row axis: fill the remaining per-buffer budget with multiples of 8.
    if R < 8:
        rt = R  # full extent (layout-legal)
    else:
        rt = _round_down(budget // nt, 8)
        rt = max(rt, 8)
        rt = min(rt, _round_down(R, 8))

    # v7x megacore: make sure the parallel row axis has >= 2 blocks whenever
    # there are enough rows (costs one extra ~0.35 us grid step; no effect on
    # the single-TC v5e/v6e).
    if rt >= R and R >= 16:
        rt = max(8, _round_down(-(-R // 2), 8))  # ceil(R/2) rounded down to 8

    return rt, nt


# ---------------------------------------------------------------------------
# Wrapper (the PyTorch forward)
# ---------------------------------------------------------------------------
def max_pooling_forward(input_data, num_channels, num_points, *, max_tile_bytes=None):
    """Pallas implementation of MaxPooling.forward.  Returns (B, num_channels)."""
    total = input_data.size
    assert total % (num_channels * num_points) == 0, "input size incompatible with view"
    B = total // (num_channels * num_points)

    # torch: .view(-1, C, N) then max over N; flattening (B, C) keeps the same
    # row-major layout, so operate on the 2-D (R, N) view directly.
    x = jnp.reshape(input_data, (B * num_channels, num_points))
    R, N = x.shape
    itemsize = jnp.dtype(x.dtype).itemsize

    # Generation-aware VMEM capacity (64 MiB on v7x, 128 MiB on v5e/v6e).
    vmem_cap = 64 << 20  # conservative fallback
    try:
        info = pltpu.get_tpu_info()
        vmem_cap = int(getattr(info, "vmem_capacity_bytes", vmem_cap))
    except Exception:
        pass

    if max_tile_bytes is None:
        # ~16 MiB per input buffer (double-buffered -> 32 MiB pipelined), but
        # never more than what leaves headroom inside the generation's VMEM.
        per_buffer = min(16 << 20, max(((vmem_cap * 3) // 4 - (4 << 20)) // 2, 1 << 20))
    else:
        per_buffer = max_tile_bytes

    rt, nt = _choose_tiles(R, N, itemsize, per_buffer)
    grid = (pl.cdiv(R, rt), pl.cdiv(N, nt))
    need_mask = (N % nt) != 0

    if jnp.issubdtype(x.dtype, jnp.floating):
        fill = float("-inf")
    else:
        fill = int(jnp.iinfo(x.dtype).min)

    kernel = functools.partial(
        _maxpool_kernel, nt=nt, n_total=N, need_mask=need_mask, fill=fill
    )

    # VMEM accounting: double-buffered input tile + (small) output blocks,
    # plus explicit headroom; never request more than ~90% of physical VMEM.
    usage = 2 * rt * nt * itemsize + 2 * rt * itemsize + (2 << 20)
    vmem_limit = int(min(max(usage, 4 << 20), (vmem_cap * 9) // 10))

    out = pl.pallas_call(
        kernel,
        out_shape=jax.ShapeDtypeStruct((R, 1), x.dtype),
        grid_spec=pltpu.PrefetchScalarGridSpec(
            num_scalar_prefetch=0,
            grid=grid,
            in_specs=[pl.BlockSpec((rt, nt), lambda r, n: (r, n))],
            # Same row block for every point step -> VMEM-resident accumulator.
            out_specs=pl.BlockSpec((rt, 1), lambda r, n: (r, 0)),
        ),
        compiler_params=pltpu.CompilerParams(
            dimension_semantics=("parallel", "arbitrary"),
            vmem_limit_bytes=vmem_limit,
        ),
    )(x)

    # torch: out.view(-1, num_channels)
    return jnp.reshape(out, (B, num_channels))


# ---------------------------------------------------------------------------
# Pure-JAX reference mirroring the torch forward (for validation).
# ---------------------------------------------------------------------------
def max_pooling_ref(input_data, num_channels, num_points):
    x = jnp.reshape(input_data, (-1, num_channels, num_points))
    return jnp.max(x, axis=-1)


if __name__ == "__main__":
    key = jax.random.PRNGKey(0)
    k1, k2, k3, k4 = jax.random.split(key, 4)

    def _check(x, C, N, **kw):
        out = jax.block_until_ready(max_pooling_forward(x, C, N, **kw))
        ref = max_pooling_ref(x, C, N)
        assert out.shape == ref.shape
        np.testing.assert_allclose(np.asarray(out), np.asarray(ref), rtol=0, atol=0)

    # Case 1: small shapes matching the module (batch=2, channels=4, points=16).
    B1, C1, N1 = 2, 4, 16
    x1 = jax.random.normal(k1, (B1, C1, N1), jnp.float32)
    _check(x1, C1, N1)

    # Case 2: aligned dims exercising full-N slabs + >=2 parallel row blocks
    # (R = 512 rows split into two 256-row blocks, nt = N = 384, no carry).
    B2, C2, N2 = 2, 256, 384
    x2 = jax.random.normal(k2, (B2 * N2, C2), jnp.float32)  # flat producer layout
    _check(x2, C2, N2)

    # Case 3: tiny forced budget -> point-axis tiling with reduction carry and
    # -inf masking of the non-dividing last point block.
    B3, C3, N3 = 1, 16, 1000
    x3 = jax.random.normal(k3, (B3, C3, N3), jnp.float32)
    _check(x3, C3, N3, max_tile_bytes=16 * 1024)

    # Case 4: unaligned row count (R = 12) -> harmless partial last row block.
    B4, C4, N4 = 3, 4, 16
    x4 = jax.random.normal(k4, (B4 * N4, C4), jnp.float32)
    _check(x4, C4, N4)

    print("KERNEL_OK")
</pallas_src>

<mosaic_0001>
module attributes {stable_mosaic.version = 11 : i64} {
  func.func @_maxpool_kernel(%arg0: i32, %arg1: i32, %arg2: memref<8x16xf32, #tpu.memory_space<vmem>>, %arg3: memref<8x1xf32, #tpu.memory_space<vmem>>) attributes {dimension_semantics = [#tpu.dimension_semantics<parallel>, #tpu.dimension_semantics<arbitrary>], iteration_bounds = array<i64: 1, 1>, scalar_prefetch = 0 : i64, scratch_operands = 0 : i64, tpu.core_type = #tpu.core_type<tc>, window_params = [{transform_indices = @transform_0, window_bounds = array<i64: 8, 16>}, {transform_indices = @transform_1, window_bounds = array<i64: 8, 1>}]} {
    %c0 = arith.constant 0 : index
    %c0_0 = arith.constant 0 : index
    %0 = vector.load %arg2[%c0, %c0_0] : memref<8x16xf32, #tpu.memory_space<vmem>>, vector<8x16xf32>
    %cst = arith.constant dense<0xFF800000> : vector<8xf32>
    %1 = vector.multi_reduction <maximumf>, %0, %cst [1] : vector<8x16xf32> to vector<8xf32>
    %2 = vector.shape_cast %1 : vector<8xf32> to vector<8x1xf32>
    %c0_i32 = arith.constant 0 : i32
    %3 = arith.cmpi eq, %arg1, %c0_i32 : i32
    %4 = arith.extui %3 : i1 to i32
    %c0_i32_1 = arith.constant 0 : i32
    %5 = arith.cmpi ne, %4, %c0_i32_1 : i32
    scf.if %5 {
      %c0_4 = arith.constant 0 : index
      %c0_5 = arith.constant 0 : index
      %9 = vector.load %arg3[%c0_4, %c0_5] : memref<8x1xf32, #tpu.memory_space<vmem>>, vector<8x1xf32>
      tpu.vector_store %arg3[%c0_4, %c0_5], %2 {strides = array<i32>} : memref<8x1xf32, #tpu.memory_space<vmem>>, vector<8x1xf32>,
    } else {
    }
    %c0_i32_2 = arith.constant 0 : i32
    %6 = arith.cmpi sgt, %arg1, %c0_i32_2 : i32
    %7 = arith.extui %6 : i1 to i32
    %c0_i32_3 = arith.constant 0 : i32
    %8 = arith.cmpi ne, %7, %c0_i32_3 : i32
    scf.if %8 {
      %c0_4 = arith.constant 0 : index
      %c0_5 = arith.constant 0 : index
      %9 = vector.load %arg3[%c0_4, %c0_5] : memref<8x1xf32, #tpu.memory_space<vmem>>, vector<8x1xf32>
      %10 = arith.maximumf %9, %2 : vector<8x1xf32>
      %c0_6 = arith.constant 0 : index
      %c0_7 = arith.constant 0 : index
      %11 = vector.load %arg3[%c0_6, %c0_7] : memref<8x1xf32, #tpu.memory_space<vmem>>, vector<8x1xf32>
      tpu.vector_store %arg3[%c0_6, %c0_7], %10 {strides = array<i32>} : memref<8x1xf32, #tpu.memory_space<vmem>>, vector<8x1xf32>,
    } else {
    }
    return
  }
  func.func @transform_0(%arg0: i32, %arg1: i32) -> (i32, i32) {
    %c0_i32 = arith.constant 0 : i32
    return %arg0, %arg1 : i32, i32
  }
  func.func @transform_1(%arg0: i32, %arg1: i32) -> (i32, i32) {
    %c0_i32 = arith.constant 0 : i32
    %c0_i32_0 = arith.constant 0 : i32
    return %arg0, %c0_i32 : i32, i32
  }
}

</mosaic_0001>

<llo_original>
// kernel: tpu_custom_call.1
$region0: #{tpu_custom_call.1}
  #allocation0 [shape = 'u32[]', space=smem, size = 0x4, offset = 0x4, fixed_abs, tag = 'smem constant byte address 0x4 - core index']
  #allocation1 [shape = 'u32[144,128]{1,0:T(1,128)}', space=vmem, size = 0x12000, scoped, tag = 'internal scratch']
  %s0 = inlined_call_operand.hbm [shape: f32[8,16], index: 0, kind: input, shape index: {}]
  %s1 = inlined_call_operand.vmem [shape: f32[8,1], index: 1, kind: output, shape index: {}]
  %s2 = sld [smem:[#allocation0]]
  $region26: #{tpu_custom_call.1} parent=0
    _
  %s4 = ssub.s32 1, %s2
  %s5 = scalar_select 0, %s4, %s2
  $region1: #{tpu_custom_call.1} parent=0
    #allocation2 [shape = 'u8[4096]{0}', space=vmem, size = 0x1000, scoped, tag = 'input window, operand 0, single buffered']
    #allocation3 [shape = 's32[1]{0}', space=sflag, size = 0x4, scoped, tag = 'scoped memory for tpu_custom_call.1']
    %6 = vsyncpa [#allocation3], 0
    // Predicated region
    $region2: #{tpu_custom_call.1} parent=1 // pred_check
      _
    $region3: #{tpu_custom_call.1} parent=1 // pred_check_branch
      %8 = sbr.rel (0) target = $region5
    $region4: #{tpu_custom_call.1} parent=1 // pred_region
      %s10 = ssub.s32 128, 128
      %11 = vsyncadd [#allocation3], %s10
      %s13 = sshll.u32 [#allocation2], 4
      %s14 = int_to_ptr.vmem [resolvable:$true] %s13
      %16 = dma.hbm_to_vmem [thread:$0]  %s0, 128, %s14, [#allocation3]
    $region5: #{tpu_custom_call.1} parent=1 // pred_fallthru
      _
    // Predicated region
    $region6: #{tpu_custom_call.1} parent=1 // pred_check
      _
    $region7: #{tpu_custom_call.1} parent=1 // pred_check_branch
      %18 = sbr.rel (0) target = $region9
    $region8: #{tpu_custom_call.1} parent=1 // pred_region
      %19 = dma.done [#allocation3], 128
    $region9: #{tpu_custom_call.1} parent=1 // pred_fallthru
      _
    %v20 = vld [vmem:[#allocation2] sm:$0xff]
    %vm21 = vcmask 130048
    %v22 = vsel %vm21, %v20, -inf
    %23 = vmax.xlane.f32.xlu0 %v22
    %v24 = vpop.xlane.xlu0 %23
    %p25 = scmp.eq.s32.totalorder 0, 0
    // Predicated region
    $region10: #{tpu_custom_call.1} parent=1 // pred_check
      %p26 = pneg %p25
    $region11: #{tpu_custom_call.1} parent=1 // pred_check_branch
      %28 = sbr.rel (%p26) target = $region13
    $region12: #{tpu_custom_call.1} parent=1 // pred_region
      %vm29 = vcmask 7168
      %30 = vst.msk [vmem:[%s1] sm:$0xff] %vm29, %v24
    $region13: #{tpu_custom_call.1} parent=1 // pred_fallthru
      _
    %p31 = scmp.gt.s32.totalorder 0, 0
    // Predicated region
    $region14: #{tpu_custom_call.1} parent=1 // pred_check
      %p32 = pneg %p31
    $region15: #{tpu_custom_call.1} parent=1 // pred_check_branch
      %34 = sbr.rel (%p32) target = $region17
    $region16: #{tpu_custom_call.1} parent=1 // pred_region
      %v35 = vld [vmem:[%s1] sm:$0xff]
      %v36 = vmax.f32 %v35, %v24
      %vm37 = vcmask 7168
      %38 = vst.msk [vmem:[%s1] sm:$0xff] %vm37, %v36
    $region17: #{tpu_custom_call.1} parent=1 // pred_fallthru
      _
    // Predicated region
    $region18: #{tpu_custom_call.1} parent=1 // pred_check
      _
    $region19: #{tpu_custom_call.1} parent=1 // pred_check_branch
      %40 = sbr.rel (0) target = $region21
    $region20: #{tpu_custom_call.1} parent=1 // pred_region
      _
    $region21: #{tpu_custom_call.1} parent=1 // pred_fallthru
      _
    // Predicated region
    $region22: #{tpu_custom_call.1} parent=1 // pred_check
      _
    $region23: #{tpu_custom_call.1} parent=1 // pred_check_branch
      %42 = sbr.rel (0) target = $region25
    $region24: #{tpu_custom_call.1} parent=1 // pred_region
      _
    $region25: #{tpu_custom_call.1} parent=1 // pred_fallthru
      _
    %43 = vsyncpa [#allocation3], 1

</llo_original>
